<compile_context>
chip_gen: v7x
topology: tpu7x:2x2x1
jax: 0.10.0
libtpu: 0.0.40
codegen_flags: <defaults>
</compile_context>

<pallas_src>
import functools
import math

import jax
import jax.numpy as jnp
from jax.experimental import pallas as pl
from jax.experimental.pallas import tpu as pltpu


# ------------------------------- kernel --------------------------------------

def _loss_rec_kernel(pred_ref, gt_ref, out_ref, *, img_h, img_w, pack,
                     packed_rows, tile_rows, ragged, tensor_grad,
                     gradient_l1):
    p = pred_ref[...].astype(jnp.float32)
    g = gt_ref[...].astype(jnp.float32)

    d = p - g
    contrib = d * d                                      # squared error term

    if tensor_grad:
        trp, pw = p.shape
        col = jax.lax.broadcasted_iota(jnp.int32, (1, pw), 1)
        left_edge = (col % img_w) == 0                   # j == 0 inside image
        shift_up = img_w % pw                            # 0 when pack == 1
        whole_images = (pack % img_h) == 0               # static Python bool

        if whole_images:
            # Each packed row holds complete images -> image-top is lane-only.
            at_top = (col % (img_h * img_w)) < img_w     # (1, pw)
        else:
            seg0 = col < img_w                           # first packed segment
            row = jax.lax.broadcasted_iota(jnp.int32, (trp, 1), 0)
            top_row = (row % (img_h // pack)) == 0       # (trp, 1)

        def tgrad(x):
            # Left neighbour: lane roll by 1, zeroed at each image's column 0.
            xl = jnp.where(left_edge, 0.0, pltpu.roll(x, 1, axis=1))
            # Up neighbour: previous original row = lane roll by W within the
            # packed row ...
            xu = pltpu.roll(x, shift_up, axis=1) if shift_up else x
            if whole_images:
                xu = jnp.where(at_top, 0.0, xu)
            else:
                # ... segment 0 wraps to the previous packed row (sublane
                # roll), except at each image's first row (zero).
                xu = jnp.where(seg0, pltpu.roll(xu, 1, axis=0), xu)
                xu = jnp.where(top_row & seg0, 0.0, xu)
            gx = xl - x
            gy = xu - x
            if gradient_l1:
                return jnp.abs(gx) + jnp.abs(gy)
            return jnp.sqrt(gx * gx + gy * gy)

        contrib = contrib + jnp.abs(tgrad(p) - tgrad(g))

    if ragged:
        # Last (partial) tile: zero contributions from out-of-range rows.
        trp = contrib.shape[0]
        row = jax.lax.broadcasted_iota(jnp.int32, (trp, 1), 0)
        valid = (pl.program_id(0) * tile_rows + row) < packed_rows
        contrib = jnp.where(valid, contrib, 0.0)

    # One fused reduction per tile (lane reduce, then sublane reduce).
    part = jnp.sum(jnp.sum(contrib, axis=1, keepdims=True),
                   axis=0, keepdims=True)                # (1, 1)
    out_ref[...] = jnp.broadcast_to(part, (1, 128))      # lane-dense store


# ------------------------------- wrapper --------------------------------------

def _choose_pack(img_h, img_w, rows, max_pw=512):
    """Lane-packing factor k for the free reshape (rows, W) -> (rows/k, k*W).

    k is either a divisor of H (images split across packed rows) or a
    multiple of H (whole images per packed row); both keep the gradient
    masks cheap.  Prefer packed widths that are multiples of 128 lanes.
    """
    if img_w >= 128:
        return 1
    cands = {1}
    for d in range(1, img_h + 1):
        if img_h % d == 0 and d * img_w <= max_pw:
            cands.add(d)
    m = img_h
    while m * img_w <= max_pw:
        if rows % m == 0:
            cands.add(m)
        m += img_h
    return max(cands, key=lambda k: ((k * img_w) % 128 == 0, k * img_w))


def loss_rec(pred, ground_truth, *, tensor_grad=True, gradient_l1=True,
             block_bytes=1 << 20):
    """Pallas LossRec: MSE + (optional) L1 of tensor gradients.

    pred / ground_truth: [..., H, W] (e.g. NCHW images), same shape & dtype.
    Returns a scalar f32 loss.
    """
    assert pred.shape == ground_truth.shape, "pred / ground_truth shape mismatch"
    assert pred.ndim >= 2, "inputs must be at least [..., H, W]"
    img_h, img_w = pred.shape[-2], pred.shape[-1]
    rows = math.prod(pred.shape[:-1])               # (leading dims) * H
    n_elems = rows * img_w

    # Lane packing (free contiguous reshape, no HBM relayout).
    pack = _choose_pack(img_h, img_w, rows)
    assert rows % pack == 0 and (img_h % pack == 0 or pack % img_h == 0)
    pw = pack * img_w
    packed_rows = rows // pack
    x = pred.reshape(packed_rows, pw)
    y = ground_truth.reshape(packed_rows, pw)

    # Tile rows from a VMEM byte budget, aligned so that image boundaries and
    # the in-kernel masks stay consistent across tiles.
    itemsize = jnp.dtype(pred.dtype).itemsize
    sublane = {4: 8, 2: 16, 1: 32}.get(itemsize, 8)
    row_align = 1 if pack % img_h == 0 else img_h // pack
    align = row_align * sublane // math.gcd(row_align, sublane)
    trp_cap = max(1, block_bytes // (pw * itemsize))
    if trp_cap >= packed_rows:
        tile_rows = packed_rows                      # full-extent block
    else:
        tile_rows = (trp_cap // align) * align
        if tile_rows == 0:
            tile_rows = min(align, packed_rows)
    n_tiles = -(-packed_rows // tile_rows)           # cdiv
    ragged = (packed_rows % tile_rows) != 0

    flops_per_elem = 3 + (22 if tensor_grad else 0)
    cost = pl.CostEstimate(
        flops=int(n_elems * flops_per_elem),
        transcendentals=int(0 if (gradient_l1 or not tensor_grad)
                            else 2 * n_elems),
        bytes_accessed=int(2 * n_elems * itemsize + n_tiles * 128 * 4),
    )

    kernel = functools.partial(
        _loss_rec_kernel,
        img_h=img_h, img_w=img_w, pack=pack,
        packed_rows=packed_rows, tile_rows=tile_rows, ragged=ragged,
        tensor_grad=tensor_grad, gradient_l1=gradient_l1,
    )

    partials = pl.pallas_call(
        kernel,
        out_shape=jax.ShapeDtypeStruct((1, n_tiles * 128), jnp.float32),
        grid_spec=pltpu.PrefetchScalarGridSpec(
            num_scalar_prefetch=0,
            grid=(n_tiles,),
            in_specs=[
                pl.BlockSpec((tile_rows, pw), lambda i: (i, 0)),
                pl.BlockSpec((tile_rows, pw), lambda i: (i, 0)),
            ],
            out_specs=pl.BlockSpec((1, 128), lambda i: (0, i)),
        ),
        compiler_params=pltpu.CompilerParams(
            dimension_semantics=("parallel",),       # tiles are independent
            vmem_limit_bytes=32 * 1024 * 1024,
        ),
        cost_estimate=cost,
    )(x, y)

    per_tile = partials.reshape(n_tiles, 128)[:, 0]  # lane 0 of each tile block
    return jnp.sum(per_tile) * jnp.float32(1.0 / n_elems)


# ----------------------- pure-JAX reference (validation) ---------------------

def _tensor_gradient_ref(img, l1=True):
    h, w = img.shape[-2], img.shape[-1]
    pad_w = [(0, 0)] * (img.ndim - 1) + [(1, 0)]
    pad_h = [(0, 0)] * (img.ndim - 2) + [(1, 0), (0, 0)]
    left = jnp.pad(img, pad_w)[..., :, :w]     # img[..., i, j-1], 0 at j == 0
    up = jnp.pad(img, pad_h)[..., :h, :]       # img[..., i-1, j], 0 at i == 0
    gx = left - img
    gy = up - img
    if l1:
        return jnp.abs(gx) + jnp.abs(gy)
    return jnp.sqrt(gx * gx + gy * gy)


def _loss_rec_ref(pred, gt, tensor_grad=True, gradient_l1=True):
    loss = jnp.mean((pred - gt) ** 2)
    if tensor_grad:
        loss = loss + jnp.mean(jnp.abs(_tensor_gradient_ref(pred, gradient_l1)
                                       - _tensor_gradient_ref(gt, gradient_l1)))
    return loss


if __name__ == "__main__":
    root = jax.random.PRNGKey(0)

    def run_check(idx, shape, dtype=jnp.float32, tensor_grad=True,
                  gradient_l1=True, block_bytes=1 << 20,
                  atol=1e-5, rtol=1e-4):
        kp, kg = jax.random.split(jax.random.fold_in(root, idx))
        pred = jax.random.normal(kp, shape, jnp.float32).astype(dtype)
        gt = jax.random.normal(kg, shape, jnp.float32).astype(dtype)
        got = jax.block_until_ready(
            loss_rec(pred, gt, tensor_grad=tensor_grad,
                     gradient_l1=gradient_l1, block_bytes=block_bytes))
        ref = _loss_rec_ref(pred.astype(jnp.float32), gt.astype(jnp.float32),
                            tensor_grad=tensor_grad, gradient_l1=gradient_l1)
        assert got.shape == ()
        assert jnp.allclose(got, ref, atol=atol, rtol=rtol), (shape, got, ref)

    # Default LossRec(gradient_L1=True, tensor_grad=True) on NCHW images.
    run_check(0, (2, 4, 16, 16))
    # MSE-only and L2-gradient variants.
    run_check(1, (2, 4, 16, 16), tensor_grad=False)
    run_check(2, (2, 4, 16, 16), gradient_l1=False)
    # Images split across packed rows + multi-tile ragged grid (tiny block
    # budget forces several tiles with a partial last tile).
    run_check(3, (2, 3, 16, 48), block_bytes=4096)
    # Wide image (no lane packing, pure sublane-shift path).
    run_check(4, (1, 1, 16, 256))
    # bf16 inputs (upcast to f32 inside the kernel).
    run_check(5, (2, 2, 16, 16), dtype=jnp.bfloat16, atol=1e-4, rtol=1e-3)

    print("KERNEL_OK")
</pallas_src>

<mosaic_0001>
module attributes {stable_mosaic.version = 11 : i64} {
  func.func @_loss_rec_kernel(%arg0: i32, %arg1: memref<4x512xf32, #tpu.memory_space<vmem>>, %arg2: memref<4x512xf32, #tpu.memory_space<vmem>>, %arg3: memref<1x128xf32, #tpu.memory_space<vmem>>) attributes {dimension_semantics = [#tpu.dimension_semantics<parallel>], iteration_bounds = array<i64: 1>, scalar_prefetch = 0 : i64, scratch_operands = 0 : i64, tpu.core_type = #tpu.core_type<tc>, window_params = [{transform_indices = @transform_0, window_bounds = array<i64: 4, 512>}, {transform_indices = @transform_1, window_bounds = array<i64: 4, 512>}, {transform_indices = @transform_2, window_bounds = array<i64: 1, 128>}]} {
    %c0 = arith.constant 0 : index
    %c0_0 = arith.constant 0 : index
    %0 = vector.load %arg1[%c0, %c0_0] : memref<4x512xf32, #tpu.memory_space<vmem>>, vector<4x512xf32>
    %c0_1 = arith.constant 0 : index
    %c0_2 = arith.constant 0 : index
    %1 = vector.load %arg2[%c0_1, %c0_2] : memref<4x512xf32, #tpu.memory_space<vmem>>, vector<4x512xf32>
    %2 = arith.subf %0, %1 : vector<4x512xf32>
    %3 = arith.mulf %2, %2 : vector<4x512xf32>
    %4 = tpu.iota {dimensions = array<i32: 1>} : vector<1x512xi32>
    %c16_i32 = arith.constant 16 : i32
    %c0_i32 = arith.constant 0 : i32
    %5 = arith.cmpi eq, %c16_i32, %c0_i32 : i32
    %c1_i32 = arith.constant 1 : i32
    %6 = arith.select %5, %c1_i32, %c16_i32 : i32
    %7 = vector.broadcast %6 : i32 to vector<1x512xi32>
    %8 = arith.remsi %4, %7 : vector<1x512xi32>
    %c0_i32_3 = arith.constant 0 : i32
    %9 = vector.broadcast %c0_i32_3 : i32 to vector<1x512xi32>
    %10 = arith.cmpi ne, %8, %9 : vector<1x512xi32>
    %c0_i32_4 = arith.constant 0 : i32
    %11 = vector.broadcast %c0_i32_4 : i32 to vector<1x512xi32>
    %12 = arith.cmpi slt, %8, %11 : vector<1x512xi32>
    %c0_i32_5 = arith.constant 0 : i32
    %13 = arith.cmpi slt, %6, %c0_i32_5 : i32
    %14 = vector.broadcast %13 : i1 to vector<1x512xi1>
    %15 = vector.broadcast %14 : vector<1x512xi1> to vector<1x512xi1>
    %16 = arith.xori %12, %15 : vector<1x512xi1>
    %17 = arith.andi %16, %10 : vector<1x512xi1>
    %18 = vector.broadcast %6 : i32 to vector<1x512xi32>
    %19 = arith.addi %8, %18 : vector<1x512xi32>
    %20 = arith.select %17, %19, %8 : vector<1x512xi1>, vector<1x512xi32>
    %c0_i32_6 = arith.constant 0 : i32
    %21 = vector.broadcast %c0_i32_6 : i32 to vector<1x512xi32>
    %22 = arith.cmpi eq, %20, %21 : vector<1x512xi32>
    %c256_i32 = arith.constant 256 : i32
    %c0_i32_7 = arith.constant 0 : i32
    %23 = arith.cmpi eq, %c256_i32, %c0_i32_7 : i32
    %c1_i32_8 = arith.constant 1 : i32
    %24 = arith.select %23, %c1_i32_8, %c256_i32 : i32
    %25 = vector.broadcast %24 : i32 to vector<1x512xi32>
    %26 = arith.remsi %4, %25 : vector<1x512xi32>
    %c0_i32_9 = arith.constant 0 : i32
    %27 = vector.broadcast %c0_i32_9 : i32 to vector<1x512xi32>
    %28 = arith.cmpi ne, %26, %27 : vector<1x512xi32>
    %c0_i32_10 = arith.constant 0 : i32
    %29 = vector.broadcast %c0_i32_10 : i32 to vector<1x512xi32>
    %30 = arith.cmpi slt, %26, %29 : vector<1x512xi32>
    %c0_i32_11 = arith.constant 0 : i32
    %31 = arith.cmpi slt, %24, %c0_i32_11 : i32
    %32 = vector.broadcast %31 : i1 to vector<1x512xi1>
    %33 = vector.broadcast %32 : vector<1x512xi1> to vector<1x512xi1>
    %34 = arith.xori %30, %33 : vector<1x512xi1>
    %35 = arith.andi %34, %28 : vector<1x512xi1>
    %36 = vector.broadcast %24 : i32 to vector<1x512xi32>
    %37 = arith.addi %26, %36 : vector<1x512xi32>
    %38 = arith.select %35, %37, %26 : vector<1x512xi1>, vector<1x512xi32>
    %c16_i32_12 = arith.constant 16 : i32
    %39 = vector.broadcast %c16_i32_12 : i32 to vector<1x512xi32>
    %40 = arith.cmpi slt, %38, %39 : vector<1x512xi32>
    %c1_i32_13 = arith.constant 1 : i32
    %41 = tpu.dynamic_rotate %0 by %c1_i32_13 dim 1 : vector<4x512xf32>, i32 -> vector<4x512xf32>
    %cst = arith.constant 0.000000e+00 : f32
    %42 = vector.shape_cast %22 : vector<1x512xi1> to vector<1x512xi1>
    %43 = vector.broadcast %42 : vector<1x512xi1> to vector<4x512xi1>
    %44 = vector.broadcast %cst : f32 to vector<4x512xf32>
    %45 = arith.select %43, %44, %41 : vector<4x512xi1>, vector<4x512xf32>
    %c16_i32_14 = arith.constant 16 : i32
    %46 = tpu.dynamic_rotate %0 by %c16_i32_14 dim 1 : vector<4x512xf32>, i32 -> vector<4x512xf32>
    %cst_15 = arith.constant 0.000000e+00 : f32
    %47 = vector.shape_cast %40 : vector<1x512xi1> to vector<1x512xi1>
    %48 = vector.broadcast %47 : vector<1x512xi1> to vector<4x512xi1>
    %49 = vector.broadcast %cst_15 : f32 to vector<4x512xf32>
    %50 = arith.select %48, %49, %46 : vector<4x512xi1>, vector<4x512xf32>
    %51 = arith.subf %45, %0 : vector<4x512xf32>
    %52 = arith.subf %50, %0 : vector<4x512xf32>
    %53 = math.absf %51 : vector<4x512xf32>
    %54 = math.absf %52 : vector<4x512xf32>
    %55 = arith.addf %53, %54 : vector<4x512xf32>
    %c1_i32_16 = arith.constant 1 : i32
    %56 = tpu.dynamic_rotate %1 by %c1_i32_16 dim 1 : vector<4x512xf32>, i32 -> vector<4x512xf32>
    %cst_17 = arith.constant 0.000000e+00 : f32
    %57 = vector.shape_cast %22 : vector<1x512xi1> to vector<1x512xi1>
    %58 = vector.broadcast %57 : vector<1x512xi1> to vector<4x512xi1>
    %59 = vector.broadcast %cst_17 : f32 to vector<4x512xf32>
    %60 = arith.select %58, %59, %56 : vector<4x512xi1>, vector<4x512xf32>
    %c16_i32_18 = arith.constant 16 : i32
    %61 = tpu.dynamic_rotate %1 by %c16_i32_18 dim 1 : vector<4x512xf32>, i32 -> vector<4x512xf32>
    %cst_19 = arith.constant 0.000000e+00 : f32
    %62 = vector.shape_cast %40 : vector<1x512xi1> to vector<1x512xi1>
    %63 = vector.broadcast %62 : vector<1x512xi1> to vector<4x512xi1>
    %64 = vector.broadcast %cst_19 : f32 to vector<4x512xf32>
    %65 = arith.select %63, %64, %61 : vector<4x512xi1>, vector<4x512xf32>
    %66 = arith.subf %60, %1 : vector<4x512xf32>
    %67 = arith.subf %65, %1 : vector<4x512xf32>
    %68 = math.absf %66 : vector<4x512xf32>
    %69 = math.absf %67 : vector<4x512xf32>
    %70 = arith.addf %68, %69 : vector<4x512xf32>
    %71 = arith.subf %55, %70 : vector<4x512xf32>
    %72 = math.absf %71 : vector<4x512xf32>
    %73 = arith.addf %3, %72 : vector<4x512xf32>
    %cst_20 = arith.constant dense<0.000000e+00> : vector<4xf32>
    %74 = vector.multi_reduction <add>, %73, %cst_20 [1] : vector<4x512xf32> to vector<4xf32>
    %75 = vector.shape_cast %74 : vector<4xf32> to vector<4x1xf32>
    %cst_21 = arith.constant dense<0.000000e+00> : vector<1xf32>
    %76 = vector.multi_reduction <add>, %75, %cst_21 [0] : vector<4x1xf32> to vector<1xf32>
    %77 = vector.shape_cast %76 : vector<1xf32> to vector<1x1xf32>
    %78 = vector.shape_cast %77 : vector<1x1xf32> to vector<1x1xf32>
    %79 = vector.broadcast %78 : vector<1x1xf32> to vector<1x128xf32>
    %c0_22 = arith.constant 0 : index
    %c0_23 = arith.constant 0 : index
    %80 = vector.load %arg3[%c0_22, %c0_23] : memref<1x128xf32, #tpu.memory_space<vmem>>, vector<1x128xf32>
    tpu.vector_store %arg3[%c0_22, %c0_23], %79 {strides = array<i32>} : memref<1x128xf32, #tpu.memory_space<vmem>>, vector<1x128xf32>,
    return
  }
  func.func @transform_0(%arg0: i32) -> (i32, i32) {
    %c0_i32 = arith.constant 0 : i32
    %c0_i32_0 = arith.constant 0 : i32
    return %arg0, %c0_i32 : i32, i32
  }
  func.func @transform_1(%arg0: i32) -> (i32, i32) {
    %c0_i32 = arith.constant 0 : i32
    %c0_i32_0 = arith.constant 0 : i32
    return %arg0, %c0_i32 : i32, i32
  }
  func.func @transform_2(%arg0: i32) -> (i32, i32) {
    %c0_i32 = arith.constant 0 : i32
    %c0_i32_0 = arith.constant 0 : i32
    return %c0_i32, %arg0 : i32, i32
  }
}

</mosaic_0001>

<llo_original>
// kernel: tpu_custom_call.1
$region0: #{tpu_custom_call.1}
  #allocation0 [shape = 'u32[]', space=smem, size = 0x4, offset = 0x4, fixed_abs, tag = 'smem constant byte address 0x4 - core index']
  #allocation1 [shape = 'u32[144,128]{1,0:T(1,128)}', space=vmem, size = 0x12000, scoped, tag = 'internal scratch']
  %s0 = inlined_call_operand.hbm [shape: f32[4,512], index: 0, kind: input, shape index: {}]
  %s1 = inlined_call_operand.hbm [shape: f32[4,512], index: 1, kind: input, shape index: {}]
  %s2 = inlined_call_operand.hbm [shape: f32[1,128], index: 2, kind: output, shape index: {}]
  %s3 = sld [smem:[#allocation0]]
  $region26: #{tpu_custom_call.1} parent=0
    _
  %s5 = ssub.s32 1, %s3
  %s6 = scalar_select 0, %s5, %s3
  $region1: #{tpu_custom_call.1} parent=0
    #allocation2 [shape = 'u8[8192]{0}', space=vmem, size = 0x2000, scoped, tag = 'input window, operand 0, single buffered']
    #allocation3 [shape = 's32[1]{0}', space=sflag, size = 0x4, scoped, tag = 'scoped memory for tpu_custom_call.1']
    #allocation4 [shape = 's32[1]{0}', space=sflag, size = 0x4, scoped, tag = 'scoped memory for tpu_custom_call.1']
    #allocation5 [shape = 'u8[8192]{0}', space=vmem, size = 0x2000, scoped, tag = 'input window, operand 1, single buffered']
    #allocation6 [shape = 's32[1]{0}', space=sflag, size = 0x4, scoped, tag = 'scoped memory for tpu_custom_call.1']
    #allocation7 [shape = 'u8[512]{0}', space=vmem, size = 0x400, scoped, tag = 'output window, operand 0, single buffered']
    %7 = vsyncpa [#allocation3], 0
    %8 = vsyncpa [#allocation6], 0
    %9 = vsyncpa [#allocation4], 0
    // Predicated region
    $region2: #{tpu_custom_call.1} parent=1 // pred_check
      _
    $region3: #{tpu_custom_call.1} parent=1 // pred_check_branch
      %11 = sbr.rel (0) target = $region5
    $region4: #{tpu_custom_call.1} parent=1 // pred_region
      %s13 = ssub.s32 256, 256
      %14 = vsyncadd [#allocation3], %s13
      %s16 = sshll.u32 [#allocation2], 4
      %s17 = int_to_ptr.vmem [resolvable:$true] %s16
      %19 = dma.hbm_to_vmem [thread:$0]  %s0, 256, %s17, [#allocation3]
    $region5: #{tpu_custom_call.1} parent=1 // pred_fallthru
      _
    // Predicated region
    $region6: #{tpu_custom_call.1} parent=1 // pred_check
      _
    $region7: #{tpu_custom_call.1} parent=1 // pred_check_branch
      %21 = sbr.rel (0) target = $region9
    $region8: #{tpu_custom_call.1} parent=1 // pred_region
      %s23 = ssub.s32 256, 256
      %24 = vsyncadd [#allocation6], %s23
      %s26 = sshll.u32 [#allocation5], 4
      %s27 = int_to_ptr.vmem [resolvable:$true] %s26
      %29 = dma.hbm_to_vmem [thread:$0]  %s1, 256, %s27, [#allocation6]
    $region9: #{tpu_custom_call.1} parent=1 // pred_fallthru
      _
    // Predicated region
    $region10: #{tpu_custom_call.1} parent=1 // pred_check
      _
    $region11: #{tpu_custom_call.1} parent=1 // pred_check_branch
      %31 = sbr.rel (0) target = $region13
    $region12: #{tpu_custom_call.1} parent=1 // pred_region
      %32 = dma.done [#allocation3], 256
    $region13: #{tpu_custom_call.1} parent=1 // pred_fallthru
      _
    // Predicated region
    $region14: #{tpu_custom_call.1} parent=1 // pred_check
      _
    $region15: #{tpu_custom_call.1} parent=1 // pred_check_branch
      %34 = sbr.rel (0) target = $region17
    $region16: #{tpu_custom_call.1} parent=1 // pred_region
      %35 = dma.done [#allocation6], 256
    $region17: #{tpu_custom_call.1} parent=1 // pred_fallthru
      _
    %v36 = vld [vmem:[#allocation2] sm:$0xff]
    %v37 = vld [vmem:[#allocation2 + $0x8] sm:$0xff]
    %v38 = vld [vmem:[#allocation5] sm:$0xff]
    %v39 = vld [vmem:[#allocation5 + $0x8] sm:$0xff]
    %v40 = vsub.f32 %v36, %v38
    %v41 = vsub.f32 %v37, %v39
    %v42 = vmul.f32 %v40, %v40
    %v43 = vmul.f32 %v41, %v41
    %v44 = vlaneseq
    %v45 = vand.u32 %v44, 127
    %v46 = vadd.s32 %v45, 128
    %v47 = vadd.s32 %v45, 256
    %v48 = vadd.s32 %v45, 384
    %vm49 = vcmp.lt.s32.totalorder %v45, 0
    %v50 = vsub.s32 0, %v45
    %v51 = vsel %vm49, %v50, %v45
    %v52 = vshrl.u32 %v51, 4
    %v53 = vand.u32 %v51, 15
    %v54 = vsub.s32 0, %v53
    %v55 = vsel %vm49, %v54, %v53
    %vm56 = vcmp.lt.s32.totalorder %v46, 0
    %v57 = vsub.s32 0, %v46
    %v58 = vsel %vm56, %v57, %v46
    %v59 = vshrl.u32 %v58, 4
    %v60 = vand.u32 %v58, 15
    %v61 = vsub.s32 0, %v60
    %v62 = vsel %vm56, %v61, %v60
    %vm63 = vcmp.lt.s32.totalorder %v47, 0
    %v64 = vsub.s32 0, %v47
    %v65 = vsel %vm63, %v64, %v47
    %v66 = vshrl.u32 %v65, 4
    %v67 = vand.u32 %v65, 15
    %v68 = vsub.s32 0, %v67
    %v69 = vsel %vm63, %v68, %v67
    %vm70 = vcmp.lt.s32.totalorder %v48, 0
    %v71 = vsub.s32 0, %v48
    %v72 = vsel %vm70, %v71, %v48
    %v73 = vshrl.u32 %v72, 4
    %v74 = vand.u32 %v72, 15
    %v75 = vsub.s32 0, %v74
    %v76 = vsel %vm70, %v75, %v74
    %vm77 = vcmp.ne.s32.totalorder %v55, 0
    %vm78 = vcmp.ne.s32.totalorder %v62, 0
    %vm79 = vcmp.ne.s32.totalorder %v69, 0
    %vm80 = vcmp.ne.s32.totalorder %v76, 0
    %vm81 = vcmp.lt.s32.totalorder %v55, 0
    %vm82 = vcmp.lt.s32.totalorder %v62, 0
    %vm83 = vcmp.lt.s32.totalorder %v69, 0
    %vm84 = vcmp.lt.s32.totalorder %v76, 0
    %vm85 = vmand %vm81, %vm77
    %vm86 = vmand %vm82, %vm78
    %vm87 = vmand %vm83, %vm79
    %vm88 = vmand %vm84, %vm80
    %v89 = vadd.s32 %v55, 16
    %v90 = vadd.s32 %v62, 16
    %v91 = vadd.s32 %v69, 16
    %v92 = vadd.s32 %v76, 16
    %v93 = vsel %vm85, %v89, %v55
    %v94 = vsel %vm86, %v90, %v62
    %v95 = vsel %vm87, %v91, %v69
    %v96 = vsel %vm88, %v92, %v76
    %vm97 = vcmp.eq.s32.totalorder %v93, 0
    %vm98 = vcmp.eq.s32.totalorder %v94, 0
    %vm99 = vcmp.eq.s32.totalorder %v95, 0
    %vm100 = vcmp.eq.s32.totalorder %v96, 0
    %vm101 = vcmp.lt.s32.totalorder %v45, 0
    %v102 = vsub.s32 0, %v45
    %v103 = vsel %vm101, %v102, %v45
    %v104 = vshrl.u32 %v103, 8
    %v105 = vand.u32 %v103, 255
    %v106 = vsub.s32 0, %v105
    %v107 = vsel %vm101, %v106, %v105
    %vm108 = vcmp.lt.s32.totalorder %v46, 0
    %v109 = vsub.s32 0, %v46
    %v110 = vsel %vm108, %v109, %v46
    %v111 = vshrl.u32 %v110, 8
    %v112 = vand.u32 %v110, 255
    %v113 = vsub.s32 0, %v112
    %v114 = vsel %vm108, %v113, %v112
    %vm115 = vcmp.lt.s32.totalorder %v47, 0
    %v116 = vsub.s32 0, %v47
    %v117 = vsel %vm115, %v116, %v47
    %v118 = vshrl.u32 %v117, 8
    %v119 = vand.u32 %v117, 255
    %v120 = vsub.s32 0, %v119
    %v121 = vsel %vm115, %v120, %v119
    %vm122 = vcmp.lt.s32.totalorder %v48, 0
    %v123 = vsub.s32 0, %v48
    %v124 = vsel %vm122, %v123, %v48
    %v125 = vshrl.u32 %v124, 8
    %v126 = vand.u32 %v124, 255
    %v127 = vsub.s32 0, %v126
    %v128 = vsel %vm122, %v127, %v126
    %vm129 = vcmp.ne.s32.totalorder %v107, 0
    %vm130 = vcmp.ne.s32.totalorder %v114, 0
    %vm131 = vcmp.ne.s32.totalorder %v121, 0
    %vm132 = vcmp.ne.s32.totalorder %v128, 0
    %vm133 = vcmp.lt.s32.totalorder %v107, 0
    %vm134 = vcmp.lt.s32.totalorder %v114, 0
    %vm135 = vcmp.lt.s32.totalorder %v121, 0
    %vm136 = vcmp.lt.s32.totalorder %v128, 0
    %vm137 = vmand %vm133, %vm129
    %vm138 = vmand %vm134, %vm130
    %vm139 = vmand %vm135, %vm131
    %vm140 = vmand %vm136, %vm132
    %v141 = vadd.s32 %v107, 256
    %v142 = vadd.s32 %v114, 256
    %v143 = vadd.s32 %v121, 256
    %v144 = vadd.s32 %v128, 256
    %v145 = vsel %vm137, %v141, %v107
    %v146 = vsel %vm138, %v142, %v114
    %v147 = vsel %vm139, %v143, %v121
    %v148 = vsel %vm140, %v144, %v128
    %vm149 = vcmp.lt.s32.totalorder %v145, 16
    %vm150 = vcmp.lt.s32.totalorder %v146, 16
    %vm151 = vcmp.lt.s32.totalorder %v147, 16
    %vm152 = vcmp.lt.s32.totalorder %v148, 16
    %v155 = vcombine.high %v36, %v36
    %v156 = vcombine.high %v37, %v37
    %159 = vrot.lane.b32.xlu0 %v36, 1
    %v160 = vpop.permute.xlu0 %159
    %161 = vrot.lane.b32.xlu0 %v155, 1
    %v162 = vpop.permute.xlu0 %161
    %163 = vrot.lane.b32.xlu0 %v37, 1
    %v164 = vpop.permute.xlu0 %163
    %165 = vrot.lane.b32.xlu0 %v156, 1
    %v166 = vpop.permute.xlu0 %165
    %vm167 = vcmp.lt.s32.totalorder %v45, 1
    %v168 = vsel %vm167, %v164, %v166
    %v169 = vsel %vm167, %v162, %v164
    %v170 = vsel %vm167, %v160, %v162
    %v171 = vsel %vm167, %v166, %v160
    %v172 = vsel %vm97, 1, 0
    %v173 = vsel %vm98, 1, 0
    %v174 = vsel %vm99, 1, 0
    %v175 = vsel %vm100, 1, 0
    %vm176 = vcmp.eq.s32.totalorder %v172, 1
    %vm177 = vcmp.eq.s32.totalorder %v173, 1
    %vm178 = vcmp.eq.s32.totalorder %v174, 1
    %vm179 = vcmp.eq.s32.totalorder %v175, 1
    %v180 = vsel %vm176, 0.0, %v171
    %v181 = vsel %vm177, 0.0, %v170
    %v182 = vsel %vm178, 0.0, %v169
    %v183 = vsel %vm179, 0.0, %v168
    %184 = vrot.lane.b32.xlu0 %v36, 16
    %v185 = vpop.permute.xlu0 %184
    %186 = vrot.lane.b32.xlu0 %v155, 16
    %v187 = vpop.permute.xlu0 %186
    %188 = vrot.lane.b32.xlu0 %v37, 16
    %v189 = vpop.permute.xlu0 %188
    %190 = vrot.lane.b32.xlu0 %v156, 16
    %v191 = vpop.permute.xlu0 %190
    %vm192 = vcmp.lt.s32.totalorder %v45, 16
    %v193 = vsel %vm192, %v189, %v191
    %v194 = vsel %vm192, %v187, %v189
    %v195 = vsel %vm192, %v185, %v187
    %v196 = vsel %vm192, %v191, %v185
    %v197 = vsel %vm149, 1, 0
    %v198 = vsel %vm150, 1, 0
    %v199 = vsel %vm151, 1, 0
    %v200 = vsel %vm152, 1, 0
    %vm201 = vcmp.eq.s32.totalorder %v197, 1
    %vm202 = vcmp.eq.s32.totalorder %v198, 1
    %vm203 = vcmp.eq.s32.totalorder %v199, 1
    %vm204 = vcmp.eq.s32.totalorder %v200, 1
    %v205 = vsel %vm201, 0.0, %v196
    %v206 = vsel %vm202, 0.0, %v195
    %v207 = vsel %vm203, 0.0, %v194
    %v208 = vsel %vm204, 0.0, %v193
    %v209 = vsub.f32 %v180, %v36
    %v210 = vsub.f32 %v181, %v155
    %v211 = vsub.f32 %v182, %v37
    %v212 = vsub.f32 %v183, %v156
    %v213 = vsub.f32 %v205, %v36
    %v214 = vsub.f32 %v206, %v155
    %v215 = vsub.f32 %v207, %v37
    %v216 = vsub.f32 %v208, %v156
    %v217 = vand.u32 2147483647, %v209
    %v218 = vand.u32 2147483647, %v210
    %v219 = vand.u32 2147483647, %v211
    %v220 = vand.u32 2147483647, %v212
    %v221 = vand.u32 2147483647, %v213
    %v222 = vand.u32 2147483647, %v214
    %v223 = vand.u32 2147483647, %v215
    %v224 = vand.u32 2147483647, %v216
    %v225 = vadd.f32 %v217, %v221
    %v226 = vadd.f32 %v218, %v222
    %v227 = vadd.f32 %v219, %v223
    %v228 = vadd.f32 %v220, %v224
    %v231 = vcombine.high %v38, %v38
    %v232 = vcombine.high %v39, %v39
    %235 = vrot.lane.b32.xlu0 %v38, 1
    %v236 = vpop.permute.xlu0 %235
    %237 = vrot.lane.b32.xlu0 %v231, 1
    %v238 = vpop.permute.xlu0 %237
    %239 = vrot.lane.b32.xlu0 %v39, 1
    %v240 = vpop.permute.xlu0 %239
    %241 = vrot.lane.b32.xlu0 %v232, 1
    %v242 = vpop.permute.xlu0 %241
    %v243 = vsel %vm167, %v240, %v242
    %v244 = vsel %vm167, %v238, %v240
    %v245 = vsel %vm167, %v236, %v238
    %v246 = vsel %vm167, %v242, %v236
    %v247 = vsel %vm176, 0.0, %v246
    %v248 = vsel %vm177, 0.0, %v245
    %v249 = vsel %vm178, 0.0, %v244
    %v250 = vsel %vm179, 0.0, %v243
    %251 = vrot.lane.b32.xlu0 %v38, 16
    %v252 = vpop.permute.xlu0 %251
    %253 = vrot.lane.b32.xlu0 %v231, 16
    %v254 = vpop.permute.xlu0 %253
    %255 = vrot.lane.b32.xlu0 %v39, 16
    %v256 = vpop.permute.xlu0 %255
    %257 = vrot.lane.b32.xlu0 %v232, 16
    %v258 = vpop.permute.xlu0 %257
    %v259 = vsel %vm192, %v256, %v258
    %v260 = vsel %vm192, %v254, %v256
    %v261 = vsel %vm192, %v252, %v254
    %v262 = vsel %vm192, %v258, %v252
    %v263 = vsel %vm201, 0.0, %v262
    %v264 = vsel %vm202, 0.0, %v261
    %v265 = vsel %vm203, 0.0, %v260
    %v266 = vsel %vm204, 0.0, %v259
    %v267 = vsub.f32 %v247, %v38
    %v268 = vsub.f32 %v248, %v231
    %v269 = vsub.f32 %v249, %v39
    %v270 = vsub.f32 %v250, %v232
    %v271 = vsub.f32 %v263, %v38
    %v272 = vsub.f32 %v264, %v231
    %v273 = vsub.f32 %v265, %v39
    %v274 = vsub.f32 %v266, %v232
    %v275 = vand.u32 2147483647, %v267
    %v276 = vand.u32 2147483647, %v268
    %v277 = vand.u32 2147483647, %v269
    %v278 = vand.u32 2147483647, %v270
    %v279 = vand.u32 2147483647, %v271
    %v280 = vand.u32 2147483647, %v272
    %v281 = vand.u32 2147483647, %v273
    %v282 = vand.u32 2147483647, %v274
    %v283 = vadd.f32 %v275, %v279
    %v284 = vadd.f32 %v276, %v280
    %v285 = vadd.f32 %v277, %v281
    %v286 = vadd.f32 %v278, %v282
    %v287 = vsub.f32 %v225, %v283
    %v288 = vsub.f32 %v226, %v284
    %v289 = vsub.f32 %v227, %v285
    %v290 = vsub.f32 %v228, %v286
    %v291 = vand.u32 2147483647, %v287
    %v292 = vand.u32 2147483647, %v288
    %v293 = vand.u32 2147483647, %v289
    %v294 = vand.u32 2147483647, %v290
    %v299 = vcombine.low %v291, %v292
    %v300 = vcombine.low %v293, %v294
    %v303 = vadd.f32 %v42, %v299
    %v304 = vadd.f32 %v43, %v300
    %v307 = vcombine.high %v303, %v303
    %v308 = vcombine.high %v304, %v304
    %vm311 = vcmask 1043456
    %v312 = vsel %vm311, %v303, 0.0
    %v313 = vsel %vm311, %v307, 0.0
    %v314 = vadd.f32 %v312, %v313
    %v315 = vsel %vm311, %v304, 0.0
    %v316 = vadd.f32 %v314, %v315
    %v317 = vsel %vm311, %v308, 0.0
    %v318 = vadd.f32 %v316, %v317
    %319 = vadd.xlane.f32.xlu0 %v318
    %v320 = vpop.xlane.xlu0 %319
    %v321 = vsel %vm311, %v320, 0.0
    %v322 = vrot.slane %v321, 4
    %v323 = vadd.f32 %v321, %v322
    %v324 = vrot.slane %v323, 2
    %v325 = vadd.f32 %v323, %v324
    %v326 = vrot.slane %v325, 1
    %v327 = vadd.f32 %v325, %v326
    %328 = vst [vmem:[#allocation7] sm:$0x1] %v327
    // Predicated region
    $region18: #{tpu_custom_call.1} parent=1 // pred_check
      _
    $region19: #{tpu_custom_call.1} parent=1 // pred_check_branch
      %330 = sbr.rel (0) target = $region21
    $region20: #{tpu_custom_call.1} parent=1 // pred_region
      %s332 = ssub.s32 16, 16
      %333 = vsyncadd [#allocation4], %s332
      %s335 = sshll.u32 [#allocation7], 4
      %s336 = int_to_ptr.vmem [resolvable:$true] %s335
      %338 = dma.vmem_to_hbm [thread:$0]  %s336, 16, %s2, [#allocation4]
    $region21: #{tpu_custom_call.1} parent=1 // pred_fallthru
      _
    // Predicated region
    $region22: #{tpu_custom_call.1} parent=1 // pred_check
      _
    $region23: #{tpu_custom_call.1} parent=1 // pred_check_branch
      %340 = sbr.rel (0) target = $region25
    $region24: #{tpu_custom_call.1} parent=1 // pred_region
      %341 = dma.done [#allocation4], 16
    $region25: #{tpu_custom_call.1} parent=1 // pred_fallthru
      _
    %342 = vsyncpa [#allocation3], 1
    %343 = vsyncpa [#allocation6], 1
    %344 = vsyncpa [#allocation4], 1

</llo_original>
